<compile_context>
chip_gen: v6e
topology: v6e:2x2x1
jax: 0.10.0
libtpu: 0.0.40
codegen_flags: <defaults>
</compile_context>

<pallas_src>
import jax
import jax.numpy as jnp
from jax.experimental import pallas as pl
from jax.experimental.pallas import tpu as pltpu


def _swish_alpha_kernel(x_ref, a_ref, o_ref):
    # x_ref: (row_tile, col_tile) block, a_ref: (row_tile, 1) per-row alpha.
    x = x_ref[...]
    a = a_ref[...]
    # Compute the sigmoid in f32 (matches PyTorch's upcast for half dtypes).
    # 2 VPU muls + 1 EUP transcendental per element: nowhere near slot
    # saturation; wall time is pure HBM traffic, so the upcast is free.
    xf = x.astype(jnp.float32)
    af = a.astype(jnp.float32)
    y = xf * jax.nn.sigmoid(af * xf)
    o_ref[...] = y.astype(o_ref.dtype)


def _round_down(v, m):
    return (v // m) * m


def _sublane_for_dtype(dtype):
    # Native sublane tile: 8 rows of 32-bit -> 8 (f32), 16 (bf16/f16), 32 (int8/fp8).
    itemsize = jnp.dtype(dtype).itemsize
    return max(8, 32 // max(1, itemsize))


def _target_block_bytes():
    """Chip-aware per-block budget for x."""
    try:
        kind = jax.devices()[0].device_kind.lower()
    except Exception:
        kind = ""
    # v5e and older: 16 MiB default scoped VMEM and slower HBM -> 2 MiB blocks
    # already hide the per-step overhead; bigger buys nothing and risks the cap.
    if any(tag in kind for tag in ("v2", "v3", "v4", "v5")):
        return 2 * 1024 * 1024
    # v6e / v7x: faster HBM makes the fixed ~0.35 us/step cost relatively
    # expensive; ~4 MiB blocks amortize it and still fit v7x's smaller VMEM.
    return 4 * 1024 * 1024


def _choose_tiles(R, HW, dtype, target_bytes):
    """Pick (row_tile, col_tile) ~ target_bytes of x per block.

    Constraints: col_tile is a multiple of 128 or equals HW; row_tile is a
    multiple of the dtype's native sublane tile or equals R.
    """
    elem_bytes = jnp.dtype(dtype).itemsize
    sublane = _sublane_for_dtype(dtype)

    # Lane (last) dim.
    if HW * elem_bytes <= target_bytes or HW <= 128:
        col_tile = HW  # full array dim: always a legal block dim
    else:
        max_cols = max(128, _round_down(target_bytes // (sublane * elem_bytes), 128))
        col_tile = max(128, min(max_cols, _round_down(HW, 128)))

    # Sublane (second-to-last) dim.
    if R <= sublane:
        row_tile = R  # full array dim
    else:
        max_rows = max(sublane, _round_down(target_bytes // (col_tile * elem_bytes), sublane))
        row_tile = max(sublane, min(max_rows, _round_down(R, sublane)))

    return row_tile, col_tile


def _ensure_min_steps(R, HW, row_tile, col_tile, sublane, min_steps=8):
    """Shrink tiles (rows first, stay lane-dense) until the grid has >= min_steps
    blocks, so v7x's two TensorCores both get work and the pipeline ramps up."""
    def steps(rt, ct):
        return pl.cdiv(R, rt) * pl.cdiv(HW, ct)

    while steps(row_tile, col_tile) < min_steps and row_tile > sublane:
        row_tile = max(sublane, _round_down(max(row_tile // 2, sublane), sublane))
        if row_tile == sublane:
            break
    while steps(row_tile, col_tile) < min_steps and col_tile > 128:
        col_tile = max(128, _round_down(max(col_tile // 2, 128), 128))
        if col_tile == 128:
            break
    return row_tile, col_tile


def custom_activation(x, alpha, *, row_tile=None, col_tile=None,
                      min_pallas_bytes=4 * 1024 * 1024):
    """x: (N, C, H, W), alpha: (1, C, 1, 1). Returns x * sigmoid(alpha * x)."""
    N, C, H, W = x.shape
    R, HW = N * C, H * W
    elem_bytes = jnp.dtype(x.dtype).itemsize
    total_bytes = R * HW * elem_bytes
    sublane = _sublane_for_dtype(x.dtype)

    # Small-tensor fallback: a 1-step, lane-sparse pallas_call is dominated by
    # fixed overhead; let XLA fuse the elementwise math with neighbors instead.
    if total_bytes < min_pallas_bytes or HW < 128:
        xf = x.astype(jnp.float32)
        af = alpha.astype(jnp.float32)
        return (xf * jax.nn.sigmoid(af * xf)).astype(x.dtype)

    x2d = x.reshape(R, HW)
    # One alpha scalar per (n, c) row; kept as a thin (R, 1) column.
    a_rows = jnp.broadcast_to(alpha.reshape(1, C), (N, C)).reshape(R, 1).astype(x.dtype)

    target_bytes = _target_block_bytes()
    auto_rt, auto_ct = _choose_tiles(R, HW, x.dtype, target_bytes)
    if row_tile is None:
        row_tile = auto_rt
    else:
        row_tile = R if row_tile >= R else max(sublane, _round_down(row_tile, sublane))
    if col_tile is None:
        col_tile = auto_ct
    else:
        col_tile = HW if col_tile >= HW else max(128, _round_down(col_tile, 128))

    # Guarantee enough grid steps for double-buffering + both v7x TensorCores.
    row_tile, col_tile = _ensure_min_steps(R, HW, row_tile, col_tile, sublane)

    grid = (pl.cdiv(R, row_tile), pl.cdiv(HW, col_tile))

    # Double-buffered footprint ~= 2x(x block) + 2x(out block) + thin alpha.
    block_bytes = row_tile * col_tile * elem_bytes
    vmem_limit = int(min(28 * 1024 * 1024, max(16 * 1024 * 1024, 6 * block_bytes)))

    out2d = pl.pallas_call(
        _swish_alpha_kernel,
        out_shape=jax.ShapeDtypeStruct((R, HW), x.dtype),
        grid_spec=pltpu.PrefetchScalarGridSpec(
            num_scalar_prefetch=0,
            # NOTE: column axis MUST stay the innermost grid dim so the (i, 0)
            # alpha block is constant across the inner loop (no per-step re-DMA).
            grid=grid,
            in_specs=[
                pl.BlockSpec((row_tile, col_tile), lambda i, j: (i, j)),
                pl.BlockSpec((row_tile, 1), lambda i, j: (i, 0)),
            ],
            out_specs=pl.BlockSpec((row_tile, col_tile), lambda i, j: (i, j)),
        ),
        compiler_params=pltpu.CompilerParams(
            # Purely elementwise: both grid axes are independent -> parallel
            # (lets v7x shard the grid across its two TensorCores).
            dimension_semantics=("parallel", "parallel"),
            vmem_limit_bytes=vmem_limit,
        ),
    )(x2d, a_rows)

    return out2d.reshape(N, C, H, W)


def _reference(x, alpha):
    xf = x.astype(jnp.float32)
    af = alpha.astype(jnp.float32)
    return xf * jax.nn.sigmoid(af * xf)


if __name__ == "__main__":
    key = jax.random.PRNGKey(0)

    # 1) Primary small test at the module's natural shapes; force the Pallas
    #    path (min_pallas_bytes=0) so the kernel itself is exercised.
    N, C, H, W = 2, 4, 16, 16
    x = jax.random.normal(key, (N, C, H, W), dtype=jnp.float32)
    alpha = jnp.ones((1, C, 1, 1), dtype=jnp.float32)  # nn.Parameter(torch.ones(...))
    out = custom_activation(x, alpha, min_pallas_bytes=0)
    out = jax.block_until_ready(out)
    assert out.shape == x.shape
    assert jnp.allclose(out, _reference(x, alpha), atol=1e-6, rtol=1e-6)

    # 2) Odd spatial size + forced small tiles -> 2-D grid, multi-step pipeline,
    #    ragged (masked) tail blocks.
    k2 = jax.random.PRNGKey(1)
    N2, C2, H2, W2 = 2, 8, 14, 14  # R=16, HW=196
    x2 = jax.random.normal(k2, (N2, C2, H2, W2), dtype=jnp.float32)
    alpha2 = 0.5 + 0.1 * jnp.arange(C2, dtype=jnp.float32).reshape(1, C2, 1, 1)
    out2 = custom_activation(x2, alpha2, row_tile=8, col_tile=128, min_pallas_bytes=0)
    out2 = jax.block_until_ready(out2)
    assert jnp.allclose(out2, _reference(x2, alpha2), atol=1e-6, rtol=1e-6)

    # 3) bf16 I/O path: dtype-aware sublane rounding + f32 sigmoid inside kernel.
    k3 = jax.random.PRNGKey(2)
    N3, C3, H3, W3 = 2, 8, 32, 32
    x3 = jax.random.normal(k3, (N3, C3, H3, W3), dtype=jnp.float32).astype(jnp.bfloat16)
    alpha3 = (0.75 + 0.05 * jnp.arange(C3, dtype=jnp.float32)).reshape(1, C3, 1, 1)
    out3 = custom_activation(x3, alpha3.astype(jnp.bfloat16), min_pallas_bytes=0)
    out3 = jax.block_until_ready(out3)
    ref3 = _reference(x3, alpha3.astype(jnp.bfloat16)).astype(jnp.bfloat16)
    assert jnp.allclose(out3.astype(jnp.float32), ref3.astype(jnp.float32),
                        atol=2e-2, rtol=2e-2)

    # 4) Small-tensor fallback (auto): tiny late-stage feature map, plain jnp path.
    k4 = jax.random.PRNGKey(3)
    x4 = jax.random.normal(k4, (2, 4, 7, 7), dtype=jnp.float32)
    alpha4 = jnp.ones((1, 4, 1, 1), dtype=jnp.float32)
    out4 = jax.block_until_ready(custom_activation(x4, alpha4))
    assert jnp.allclose(out4, _reference(x4, alpha4), atol=1e-6, rtol=1e-6)

    print("KERNEL_OK")
</pallas_src>

<mosaic_0001>
module attributes {stable_mosaic.version = 11 : i64} {
  func.func @_swish_alpha_kernel(%arg0: i32, %arg1: i32, %arg2: memref<8x128xf32, #tpu.memory_space<vmem>>, %arg3: memref<8x1xf32, #tpu.memory_space<vmem>>, %arg4: memref<8x128xf32, #tpu.memory_space<vmem>>) attributes {dimension_semantics = [#tpu.dimension_semantics<parallel>, #tpu.dimension_semantics<parallel>], iteration_bounds = array<i64: 1, 2>, scalar_prefetch = 0 : i64, scratch_operands = 0 : i64, tpu.core_type = #tpu.core_type<tc>, window_params = [{transform_indices = @transform_0, window_bounds = array<i64: 8, 128>}, {transform_indices = @transform_1, window_bounds = array<i64: 8, 1>}, {transform_indices = @transform_2, window_bounds = array<i64: 8, 128>}]} {
    %c0 = arith.constant 0 : index
    %c0_0 = arith.constant 0 : index
    %0 = vector.load %arg2[%c0, %c0_0] : memref<8x128xf32, #tpu.memory_space<vmem>>, vector<8x128xf32>
    %c0_1 = arith.constant 0 : index
    %c0_2 = arith.constant 0 : index
    %1 = vector.load %arg3[%c0_1, %c0_2] : memref<8x1xf32, #tpu.memory_space<vmem>>, vector<8x1xf32>
    %2 = vector.broadcast %1 : vector<8x1xf32> to vector<8x128xf32>
    %3 = arith.mulf %2, %0 : vector<8x128xf32>
    %4 = arith.negf %3 : vector<8x128xf32>
    %5 = math.exp %4 : vector<8x128xf32>
    %cst = arith.constant 1.000000e+00 : f32
    %6 = vector.broadcast %cst : f32 to vector<8x128xf32>
    %7 = arith.addf %6, %5 : vector<8x128xf32>
    %8 = arith.divf %6, %7 : vector<8x128xf32>
    %9 = arith.mulf %0, %8 : vector<8x128xf32>
    %c0_3 = arith.constant 0 : index
    %c0_4 = arith.constant 0 : index
    %10 = vector.load %arg4[%c0_3, %c0_4] : memref<8x128xf32, #tpu.memory_space<vmem>>, vector<8x128xf32>
    tpu.vector_store %arg4[%c0_3, %c0_4], %9 {strides = array<i32>} : memref<8x128xf32, #tpu.memory_space<vmem>>, vector<8x128xf32>,
    return
  }
  func.func @transform_0(%arg0: i32, %arg1: i32) -> (i32, i32) {
    %c0_i32 = arith.constant 0 : i32
    return %arg0, %arg1 : i32, i32
  }
  func.func @transform_1(%arg0: i32, %arg1: i32) -> (i32, i32) {
    %c0_i32 = arith.constant 0 : i32
    %c0_i32_0 = arith.constant 0 : i32
    return %arg0, %c0_i32 : i32, i32
  }
  func.func @transform_2(%arg0: i32, %arg1: i32) -> (i32, i32) {
    %c0_i32 = arith.constant 0 : i32
    return %arg0, %arg1 : i32, i32
  }
}

</mosaic_0001>

<llo_original>
// kernel: tpu_custom_call.1
$region0: #{tpu_custom_call.1}
  #allocation0 [shape = 'u32[]', space=smem, size = 0x4, offset = 0x4, fixed_abs, tag = 'smem constant byte address 0x4 - core index']
  #allocation1 [shape = 'u32[144,128]{1,0:T(1,128)}', space=vmem, size = 0x12000, scoped, tag = 'internal scratch']
  %s0 = inlined_call_operand.hbm [shape: f32[8,256], index: 0, kind: input, shape index: {}]
  %s1 = inlined_call_operand.vmem [shape: f32[8,1], index: 1, kind: input, shape index: {}]
  %s2 = inlined_call_operand.hbm [shape: f32[8,256], index: 2, kind: output, shape index: {}]
  %s3 = sld [smem:[#allocation0]]
  $region45: #{tpu_custom_call.1} parent=0
    _
  %s5 = ssub.s32 1, %s3
  %s6 = scalar_select 0, %s5, %s3
  $region1: #{tpu_custom_call.1} parent=0
    #allocation2 [shape = 'u8[8192]{0}', space=vmem, size = 0x2000, scoped, tag = 'input window, operand 0']
    #allocation3 [shape = 's32[2]{0}', space=sflag, size = 0x8, scoped, tag = 'scoped memory for tpu_custom_call.1']
    #allocation4 [shape = 's32[2]{0}', space=sflag, size = 0x8, scoped, tag = 'scoped memory for tpu_custom_call.1']
    #allocation5 [shape = 'u8[8192]{0}', space=vmem, size = 0x2000, scoped, tag = 'output window, operand 0']
    %7 = vsyncpa [#allocation3], 0
    %s8 = scalar_lea.sflag [#allocation3], 1
    %9 = vsyncpa %s8, 0
    %10 = vsyncpa [#allocation4], 0
    %s11 = scalar_lea.sflag [#allocation4], 1
    %12 = vsyncpa %s11, 0
    loop: start=0, step=1, limit=4
    $region2: #{tpu_custom_call.1} parent=1 // loop_pre_header
      _
    $region3: #{tpu_custom_call.1} parent=1 // loop_header
      %s14 = sphi 0, %s18
      %p15 = scmp.ge.s32.totalorder %s14, 4
      %s21 = sphi 0, %s33
      %s22 = sphi 0, %s29
      %s23 = sphi 0, %s21
      %s24 = sphi 0, %s22
      %s25 = sphi 0, %s23
      %s26 = sphi 0, %s24
      %s38 = sphi 0, %s40
      %s41 = sphi 0, %s38
      %s42 = sphi 0, %s41
      %s58 = sphi 0, %s42
      %s64 = sphi 0, %s66
      %s67 = sphi 0, %s64
      %s68 = sphi 0, %s67
      %s84 = sphi 0, %s68
      %s92 = sphi 0, %s94
      %s95 = sphi 0, %s92
      %s96 = sphi 0, %s95
      %s112 = sphi 0, %s96
    $region4: #{tpu_custom_call.1} parent=1 // loop_header_branch
      %17 = sbr.rel (%p15) target = $region8
    $region5: #{tpu_custom_call.1} parent=1 // loop_body
      %s19 = ssub.s32 %s14, 1
      %s20 = ssub.s32 %s14, 2
      %s27 = sadd.s32 1, %s22
      %p28 = scmp.ge.s32.totalorder %s27, 2
      %s29 = scalar_select %p28, 0, %s27
      %s30 = sadd.s32 1, %s21
      %s31 = scalar_select %p28, %s30, %s21
      %p32 = scmp.ge.s32.totalorder %s31, 1
      %s33 = scalar_select %p32, 0, %s31
      %s34 = ssub.s32 %s21, %s33
      %s35 = ssub.s32 %s22, %s29
      %s36 = sor.u32 %s34, %s35
      %p37 = scmp.eq.s32.totalorder %s36, 0
      %s39 = sadd.s32 %s38, 1
      %s40 = scalar_select %p37, %s38, %s39
      %p43 = pneg %p37
      %p44 = scmp.eq.s32.totalorder %s14, 1
      %p45 = por %p43, %p44
      %p46 = scmp.ne.s32.totalorder %s38, %s41
      %p47 = scmp.eq.s32.totalorder %s14, 0
      %p48 = por %p46, %p47
      %p49 = scmp.ne.s32.totalorder %s38, %s41
      %p50 = scmp.eq.s32.totalorder %s19, 1
      %p51 = por %p49, %p50
      %p52 = scmp.ne.s32.totalorder %s41, %s42
      %p53 = scmp.eq.s32.totalorder %s19, 0
      %p54 = por %p52, %p53
      %p55 = scmp.ne.s32.totalorder %s41, %s42
      %p56 = scmp.eq.s32.totalorder %s20, 1
      %p57 = por %p55, %p56
      %p59 = scmp.ne.s32.totalorder %s42, %s58
      %p60 = scmp.eq.s32.totalorder %s20, 0
      %p61 = por %p59, %p60
      %s62 = ssub.s32 %s21, %s33
      %p63 = scmp.eq.s32.totalorder %s62, 0
      %s65 = sadd.s32 %s64, 1
      %s66 = scalar_select %p63, %s64, %s65
      %p69 = pneg %p63
      %p70 = scmp.eq.s32.totalorder %s14, 1
      %p71 = por %p69, %p70
      %p72 = scmp.ne.s32.totalorder %s64, %s67
      %p73 = scmp.eq.s32.totalorder %s14, 0
      %p74 = por %p72, %p73
      %p75 = scmp.ne.s32.totalorder %s64, %s67
      %p76 = scmp.eq.s32.totalorder %s19, 1
      %p77 = por %p75, %p76
      %p78 = scmp.ne.s32.totalorder %s67, %s68
      %p79 = scmp.eq.s32.totalorder %s19, 0
      %p80 = por %p78, %p79
      %p81 = scmp.ne.s32.totalorder %s67, %s68
      %p82 = scmp.eq.s32.totalorder %s20, 1
      %p83 = por %p81, %p82
      %p85 = scmp.ne.s32.totalorder %s68, %s84
      %p86 = scmp.eq.s32.totalorder %s20, 0
      %p87 = por %p85, %p86
      %s88 = ssub.s32 %s21, %s33
      %s89 = ssub.s32 %s22, %s29
      %s90 = sor.u32 %s88, %s89
      %p91 = scmp.eq.s32.totalorder %s90, 0
      %s93 = sadd.s32 %s92, 1
      %s94 = scalar_select %p91, %s92, %s93
      %p97 = pneg %p91
      %p98 = scmp.eq.s32.totalorder %s14, 1
      %p99 = por %p97, %p98
      %p100 = scmp.ne.s32.totalorder %s92, %s95
      %p101 = scmp.eq.s32.totalorder %s14, 0
      %p102 = por %p100, %p101
      %p103 = scmp.ne.s32.totalorder %s92, %s95
      %p104 = scmp.eq.s32.totalorder %s19, 1
      %p105 = por %p103, %p104
      %p106 = scmp.ne.s32.totalorder %s95, %s96
      %p107 = scmp.eq.s32.totalorder %s19, 0
      %p108 = por %p106, %p107
      %p109 = scmp.ne.s32.totalorder %s95, %s96
      %p110 = scmp.eq.s32.totalorder %s20, 1
      %p111 = por %p109, %p110
      %p113 = scmp.ne.s32.totalorder %s96, %s112
      %p114 = scmp.eq.s32.totalorder %s20, 0
      %p115 = por %p113, %p114
      %p116 = scmp.le.s32.totalorder 1, %s14
      %p117 = scmp.lt.s32.totalorder %s14, 3
      %p118 = pnand %p116, %p117
      %p119 = pneg %p118
      // Predicated region
      $region9: #{tpu_custom_call.1} parent=5 // pred_check
        _
      $region10: #{tpu_custom_call.1} parent=5 // pred_check_branch
        %121 = sbr.rel (%p118) target = $region12
      $region11: #{tpu_custom_call.1} parent=5 // pred_region
        %s122 = ssub.s32 %s14, 1
        // Predicated region
        $region13: #{tpu_custom_call.1} parent=11 // pred_check
          %p123 = pneg %p80
        $region14: #{tpu_custom_call.1} parent=11 // pred_check_branch
          %125 = sbr.rel (%p123) target = $region16
        $region15: #{tpu_custom_call.1} parent=11 // pred_region
          %p126 = scmp.lt.s32.totalorder %s23, 0
          %s127 = scalar_select %p126, %s23, 0
          %s128 = smul.addr %s127, 8
          %s129 = scalar_lea.vmem %s1, %s128
        $region16: #{tpu_custom_call.1} parent=11 // pred_fallthru
          _
      $region12: #{tpu_custom_call.1} parent=5 // pred_fallthru
        _
      %p130 = scmp.lt.s32.totalorder %s14, 2
      // Predicated region
      $region17: #{tpu_custom_call.1} parent=5 // pred_check
        %p131 = pneg %p130
      $region18: #{tpu_custom_call.1} parent=5 // pred_check_branch
        %133 = sbr.rel (%p131) target = $region20
      $region19: #{tpu_custom_call.1} parent=5 // pred_region
        // Predicated region
        $region21: #{tpu_custom_call.1} parent=19 // pred_check
          %p134 = pneg %p48
        $region22: #{tpu_custom_call.1} parent=19 // pred_check_branch
          %136 = sbr.rel (%p134) target = $region24
        $region23: #{tpu_custom_call.1} parent=19 // pred_region
          %s137 = sand.u32 %s38, 1
          %s138 = scalar_lea.sflag [#allocation3], %s137
          %s139 = sand.u32 %s38, 1
          %s140 = smul.addr %s139, 8
          %s141 = scalar_lea.vmem [#allocation2], %s140
          %s143 = ssub.s32 128, 128
          %144 = vsyncadd %s138, %s143
          %s145 = smul.addr %s21, 2
          %s146 = sadd.s32 %s22, %s145
          %s147 = smul.addr %s146, 128
          %s148 = scalar_lea.hbm %s0, %s147
          %s150 = sshll.u32 %s141, 4
          %s151 = int_to_ptr.vmem [resolvable:$true] %s150
          %153 = dma.hbm_to_vmem [thread:$0]  %s148, 128, %s151, %s138
        $region24: #{tpu_custom_call.1} parent=19 // pred_fallthru
          _
      $region20: #{tpu_custom_call.1} parent=5 // pred_fallthru
        _
      %p154 = scmp.le.s32.totalorder 1, %s14
      %p155 = scmp.lt.s32.totalorder %s14, 3
      %p156 = pnand %p154, %p155
      %p157 = pneg %p156
      // Predicated region
      $region25: #{tpu_custom_call.1} parent=5 // pred_check
        _
      $region26: #{tpu_custom_call.1} parent=5 // pred_check_branch
        %159 = sbr.rel (%p156) target = $region28
      $region27: #{tpu_custom_call.1} parent=5 // pred_region
        %s160 = ssub.s32 %s14, 1
        %s161 = sand.u32 %s41, 1
        %s162 = scalar_lea.sflag [#allocation3], %s161
        %s163 = sand.u32 %s41, 1
        %s164 = smul.addr %s163, 8
        %s165 = scalar_lea.vmem [#allocation2], %s164
        // Predicated region
        $region29: #{tpu_custom_call.1} parent=27 // pred_check
          %p166 = pneg %p54
        $region30: #{tpu_custom_call.1} parent=27 // pred_check_branch
          %168 = sbr.rel (%p166) target = $region32
        $region31: #{tpu_custom_call.1} parent=27 // pred_region
          %169 = dma.done %s162, 128
        $region32: #{tpu_custom_call.1} parent=27 // pred_fallthru
          _
        %s170 = sand.u32 %s41, 1
        %s171 = scalar_lea.sflag [#allocation3], %s170
        %s172 = sand.u32 %s41, 1
        %s173 = smul.addr %s172, 8
        %s174 = scalar_lea.vmem [#allocation2], %s173
        %p175 = pneg %p54
        %p176 = pneg %p51
        %p177 = scmp.lt.s32.totalorder %s23, 0
        %s178 = scalar_select %p177, %s23, 0
        %s179 = smul.addr %s178, 8
        %s180 = scalar_lea.vmem %s1, %s179
        %p181 = pneg %p80
        %p182 = pneg %p77
        %p183 = pneg %p108
        %p184 = pneg %p105
        %s185 = sand.u32 %s95, 1
        %s186 = scalar_lea.sflag [#allocation4], %s185
        %s187 = sand.u32 %s95, 1
        %s188 = smul.addr %s187, 8
        %s189 = scalar_lea.vmem [#allocation5], %s188
        %p190 = scmp.lt.s32.totalorder %s23, 0
        %s191 = scalar_select %p190, %s23, 0
        %s192 = smul.addr %s191, 8
        %s193 = scalar_lea.vmem %s1, %s192
        %v194 = vld [vmem:[%s165] sm:$0xff]
        %v195 = vld [vmem:[%s193] sm:$0xff]
        %197 = vset.pattern.permute.xlu0 0
        %198 = vperm.xlu0 %197, %v195
        %v199 = vpop.permute.xlu0 %198
        %v201 = vmul.f32 %v199, %v194
        %v202 = vxor.u32 %v201, 2147483648
        %v203 = vmul.f32 %v202, 1.442695
        %v204 = vpow.pop %v203
        %v205 = vadd.f32 %v204, 1.0
        %v206 = vrcp.pop %v205
        %v207 = vmul.f32 1.0, %v206
        %v208 = vmul.f32 %v194, %v207
        %209 = vst [vmem:[%s189] sm:$0xff] %v208
        %s210 = sand.u32 %s95, 1
        %s211 = scalar_lea.sflag [#allocation4], %s210
        %s212 = sand.u32 %s95, 1
        %s213 = smul.addr %s212, 8
        %s214 = scalar_lea.vmem [#allocation5], %s213
        // Predicated region
        $region33: #{tpu_custom_call.1} parent=27 // pred_check
          %p215 = pneg %p105
        $region34: #{tpu_custom_call.1} parent=27 // pred_check_branch
          %217 = sbr.rel (%p215) target = $region36
        $region35: #{tpu_custom_call.1} parent=27 // pred_region
          %s219 = ssub.s32 128, 128
          %220 = vsyncadd %s211, %s219
          %s221 = smul.addr %s23, 2
          %s222 = sadd.s32 %s24, %s221
          %s223 = smul.addr %s222, 128
          %s224 = scalar_lea.hbm %s2, %s223
          %s226 = sshll.u32 %s214, 4
          %s227 = int_to_ptr.vmem [resolvable:$true] %s226
          %229 = dma.vmem_to_hbm [thread:$0]  %s227, 128, %s224, %s211
        $region36: #{tpu_custom_call.1} parent=27 // pred_fallthru
          _
      $region28: #{tpu_custom_call.1} parent=5 // pred_fallthru
        _
      %p230 = scmp.le.s32.totalorder 2, %s14
      // Predicated region
      $region37: #{tpu_custom_call.1} parent=5 // pred_check
        %p231 = pneg %p230
      $region38: #{tpu_custom_call.1} parent=5 // pred_check_branch
        %233 = sbr.rel (%p231) target = $region40
      $region39: #{tpu_custom_call.1} parent=5 // pred_region
        %s234 = ssub.s32 %s14, 2
        // Predicated region
        $region41: #{tpu_custom_call.1} parent=39 // pred_check
          %p235 = pneg %p111
        $region42: #{tpu_custom_call.1} parent=39 // pred_check_branch
          %237 = sbr.rel (%p235) target = $region44
        $region43: #{tpu_custom_call.1} parent=39 // pred_region
          %s238 = sand.u32 %s96, 1
          %s239 = scalar_lea.sflag [#allocation4], %s238
          %s240 = sand.u32 %s96, 1
          %s241 = smul.addr %s240, 8
          %s242 = scalar_lea.vmem [#allocation5], %s241
          %243 = dma.done %s239, 128
        $region44: #{tpu_custom_call.1} parent=39 // pred_fallthru
          _
      $region40: #{tpu_custom_call.1} parent=5 // pred_fallthru
        _
    $region6: #{tpu_custom_call.1} parent=1 // loop_footer
      %s18 = sadd.s32 1, %s14
    $region7: #{tpu_custom_call.1} parent=1 // loop_footer_branch
      %13 = sbr.rel target = $region3
    $region8: #{tpu_custom_call.1} parent=1 // loop_exit
      _
    %244 = vsyncpa [#allocation3], 1
    %s245 = scalar_lea.sflag [#allocation3], 1
    %246 = vsyncpa %s245, 1
    %247 = vsyncpa [#allocation4], 1
    %s248 = scalar_lea.sflag [#allocation4], 1
    %249 = vsyncpa %s248, 1

</llo_original>
